<compile_context>
chip_gen: v7x
topology: tpu7x:2x2x1
jax: 0.10.0
libtpu: 0.0.40
codegen_flags: <defaults>
</compile_context>

<pallas_src>
import functools

import jax
import jax.numpy as jnp
import numpy as np
from jax.experimental import pallas as pl
from jax.experimental.pallas import tpu as pltpu

_LANE = 128
_SUBLANE = 8
_SECONDS_PER_DAY = 86400.0
_TWO_PI_OVER_DAY = 2.0 * np.pi / _SECONDS_PER_DAY
_EPS = 1e-10

# TODO(synk): the nn.Embedding lookups, GRU recurrences, EncoderLayer_notime
# transformer block, decoder Linear and the fc/cate_fc/type_fc + cosine
# similarity heads of FlashbackPlusPlus.forward are standard dense XLA ops
# (gather / scan / matmul) and are left outside the Pallas kernel.


def _round_up(x, m):
    return -(-x // m) * m


def _pair_weight_kernel(scal_ref, ti_ref, tj_ref, sxi_ref, sxj_ref,
                        syi_ref, syj_ref, w_ref, cw_ref, tw_ref):
    """Fused pairwise f_t/f_s weight kernel for one (i-block, j-block) tile.

    scal_ref (SMEM, f32[2]) holds pre-folded scalars:
      scal[0] = -lambda_t / 86400,   scal[1] = -lambda_s
    Inputs: t / s-coords tiles [bi|bj, U] with U (padded user) on the lane dim.
    Outputs: w / c_w / type_w tiles [bi, bj, U], tril (j<=i) mask fused in.
    """
    neg_lam_t_over_day = scal_ref[0]
    neg_lam_s = scal_ref[1]

    bi = ti_ref.shape[0]
    bj = tj_ref.shape[0]
    i0 = pl.program_id(0) * bi
    j0 = pl.program_id(1) * bj

    # j-side tiles loaded once per grid step.
    tj = tj_ref[...]            # [bj, U]
    sxj = sxj_ref[...]
    syj = syj_ref[...]
    # Global j index of every row of the j-block (broadcast over lanes).
    jj = jax.lax.broadcasted_iota(jnp.int32, tj.shape, 0) + j0   # [bj, U]

    eps = jnp.float32(_EPS)
    zero = jnp.float32(0.0)

    # Loop over the i rows: intermediates stay at [bj, U] (vreg-resident),
    # avoiding [bi, bj, U] temporaries that would spill.
    @pl.loop(0, bi)
    def _(i_local):
        ti_row = ti_ref[pl.ds(i_local, 1), :]     # [1, U]
        sxi_row = sxi_ref[pl.ds(i_local, 1), :]
        syi_row = syi_ref[pl.ds(i_local, 1), :]

        dt = ti_row - tj                          # [bj, U]
        dx = sxi_row - sxj
        dy = syi_row - syj
        ds = jnp.sqrt(dx * dx + dy * dy)

        # TODO(synk): on v7x (compute-bound here) a bounded-range minimax
        # polynomial for cos(2*pi*frac(dt/86400)) would cut VALU work ~2x;
        # kept generic for bit-comparability with the reference.
        cos_term = (jnp.cos(dt * jnp.float32(_TWO_PI_OVER_DAY))
                    + jnp.float32(1.0)) * jnp.float32(0.5)
        a = cos_term * jnp.exp(dt * neg_lam_t_over_day)   # f_t
        b = jnp.exp(ds * neg_lam_s)                       # f_s

        keep = jj <= (i0 + i_local)               # fused tril mask (j <= i)
        w_ref[i_local] = jnp.where(keep, a * b + eps, zero).astype(w_ref.dtype)
        cw_ref[i_local] = jnp.where(keep, a + eps, zero).astype(cw_ref.dtype)
        tw_ref[i_local] = jnp.where(keep, b + eps, zero).astype(tw_ref.dtype)


def _choose_blocks(seq, upad, out_itemsize, block_i, block_j):
    def _validate(b, name):
        assert b >= 1 and (b == seq or b % _SUBLANE == 0), (
            f"{name} must equal seq or be a multiple of 8, got {b}")
        if out_itemsize == 2 and name == "block_j":
            assert b == seq or b % 16 == 0, (
                "block_j must be a multiple of 16 (or == seq) for 16-bit outputs")
        return b

    # Adaptive default: keep the three output blocks around <= 4 MiB per step
    # (double-buffered that stays well inside every generation's scoped VMEM).
    budget = 4 << 20
    cap = 64
    while cap > _SUBLANE and 3 * cap * cap * upad * out_itemsize > budget:
        cap //= 2
    bi = seq if seq <= cap else cap
    bj = seq if seq <= cap else cap
    if block_i is not None:
        bi = _validate(block_i, "block_i")
    if block_j is not None:
        bj = _validate(block_j, "block_j")
    return bi, bj


@functools.partial(jax.jit, static_argnames=("block_i", "block_j", "out_dtype"))
def flashback_weights(t, s, lambda_t, lambda_s, *, block_i=None, block_j=None,
                      out_dtype=jnp.float32):
    """Pairwise (w_j, c_w_j, type_w_j) weights, tril-masked, each [seq,seq,user].

    t: [seq, user] timestamps (seconds);  s: [seq, user, 2] coordinates.
    lambda_t / lambda_s: shape-(1,) decay parameters (as in the PyTorch module).
    Distances and the j<=i mask are computed inside the Pallas kernel; the
    [seq,seq,user] distance tensors are never written to HBM.
    """
    seq, user = t.shape
    assert s.shape[:2] == (seq, user) and s.shape[-1] == 2

    # Absolute epoch timestamps in a wider dtype: subtract a per-user base
    # before the f32 cast so dt = t[i]-t[j] keeps precision.
    if t.dtype != jnp.float32:
        t = t - t[:1]
    tf = t.astype(jnp.float32)
    sx = s[..., 0].astype(jnp.float32)
    sy = s[..., 1].astype(jnp.float32)

    # Pad the user dim once to a lane multiple; padded lanes are sliced off.
    upad = _round_up(user, _LANE)
    if upad != user:
        pad = ((0, 0), (0, upad - user))
        tf = jnp.pad(tf, pad)
        sx = jnp.pad(sx, pad)
        sy = jnp.pad(sy, pad)

    out_itemsize = jnp.dtype(out_dtype).itemsize
    bi, bj = _choose_blocks(seq, upad, out_itemsize, block_i, block_j)
    grid = (pl.cdiv(seq, bi), pl.cdiv(seq, bj))

    i_spec = pl.BlockSpec((bi, upad), lambda i, j: (i, 0))
    j_spec = pl.BlockSpec((bj, upad), lambda i, j: (j, 0))
    out_spec = pl.BlockSpec((bi, bj, upad), lambda i, j: (i, j, 0))
    out_struct = jax.ShapeDtypeStruct((seq, seq, upad), out_dtype)

    # Pre-fold scalar math out of the kernel: [-lambda_t/86400, -lambda_s].
    lam_t = jnp.asarray(lambda_t, jnp.float32).reshape(-1)[:1]
    lam_s = jnp.asarray(lambda_s, jnp.float32).reshape(-1)[:1]
    scal = jnp.concatenate([-lam_t / jnp.float32(_SECONDS_PER_DAY), -lam_s])

    # VMEM need with the actual output itemsize; only raise the scoped limit
    # when necessary and never above 32 MiB (v7x has 64 MiB physical VMEM).
    vmem_need = 2 * (3 * bi * bj * upad * out_itemsize
                     + 3 * (bi + bj) * upad * 4)
    params = dict(dimension_semantics=("parallel", "parallel"))
    if vmem_need > (12 << 20):
        params["vmem_limit_bytes"] = int(min(vmem_need + (4 << 20), 32 << 20))

    w, cw, tw = pl.pallas_call(
        _pair_weight_kernel,
        out_shape=(out_struct, out_struct, out_struct),
        grid=grid,
        in_specs=[
            pl.BlockSpec(memory_space=pltpu.MemorySpace.SMEM),  # folded scalars
            i_spec, j_spec,      # t   (i rows / j rows)
            i_spec, j_spec,      # s_x (i rows / j rows)
            i_spec, j_spec,      # s_y (i rows / j rows)
        ],
        out_specs=(out_spec, out_spec, out_spec),
        compiler_params=pltpu.CompilerParams(**params),
    )(scal, tf, tf, sx, sx, sy, sy)

    if upad != user:
        w, cw, tw = (x[:, :, :user] for x in (w, cw, tw))
    return w, cw, tw


@functools.partial(jax.jit,
                   static_argnames=("block_i", "block_j", "weight_dtype"))
def flashback_aggregate(out_notime, c_out_notime, type_out_notime, t, s,
                        lambda_t, lambda_s, *, block_i=None, block_j=None,
                        weight_dtype=jnp.float32):
    """Vectorized equivalent of the FlashbackPlusPlus weighted-average loops.

    out_notime / c_out_notime / type_out_notime: [seq, user, hidden]
    Returns (out_w, c_out_w, type_out_w), each [seq, user, hidden].
    """
    seq, user, hidden = out_notime.shape

    # Pairwise weights with distances + tril mask fused into the Pallas kernel.
    w, cw, tw = flashback_weights(t, s, lambda_t, lambda_s,
                                  block_i=block_i, block_j=block_j,
                                  out_dtype=weight_dtype)

    f32 = jnp.float32
    ones = jnp.ones((seq, user, 1), f32)
    feats = jnp.concatenate([out_notime.astype(f32), ones], axis=-1)
    c_feats = jnp.concatenate([c_out_notime.astype(f32), ones], axis=-1)

    # MXU contraction over j (batched over user); the appended ones column
    # yields sum_w / c_sum_w from the same matmul (no extra pass over w / cw).
    ein = functools.partial(jnp.einsum, "iju,juh->iuh",
                            preferred_element_type=jnp.float32,
                            precision=jax.lax.Precision.HIGHEST)
    res = ein(w, feats)                          # [..., :hidden] num, [..., -1] sum_w
    c_res = ein(cw, c_feats)
    ty_num = ein(tw, type_out_notime.astype(f32))

    sum_w = res[..., hidden:]
    c_sum_w = c_res[..., hidden:]
    out_w = res[..., :hidden] / sum_w
    c_out_w = c_res[..., :hidden] / c_sum_w
    # Faithful to the module: type_sum_w accumulates w_j (not type_w_j).
    type_out_w = ty_num / sum_w
    return out_w, c_out_w, type_out_w


# ----------------------------- pure-JAX references --------------------------

def _reference_weights(t, s, lambda_t, lambda_s):
    seq = t.shape[0]
    dist_t = t[:, None, :] - t[None, :, :]
    dist_s = jnp.linalg.norm(s[:, None, :, :] - s[None, :, :, :], axis=-1)
    a = (jnp.cos(dist_t * 2.0 * np.pi / 86400.0) + 1.0) / 2.0 * jnp.exp(
        -(dist_t / 86400.0 * lambda_t[0]))
    b = jnp.exp(-(dist_s * lambda_s[0]))
    mask = jnp.tril(jnp.ones((seq, seq), jnp.float32))[:, :, None]
    return (a * b + 1e-10) * mask, (a + 1e-10) * mask, (b + 1e-10) * mask


def _reference_aggregate(out_notime, c_out_notime, type_out_notime, t, s,
                         lambda_t, lambda_s):
    """Literal transcription of the PyTorch double loop."""
    seq, user, hidden = out_notime.shape

    def f_t(dt):
        return (jnp.cos(dt * 2.0 * np.pi / 86400.0) + 1.0) / 2.0 * jnp.exp(
            -(dt / 86400.0 * lambda_t[0]))

    def f_s(ds):
        return jnp.exp(-(ds * lambda_s[0]))

    out_w, c_out_w, type_out_w = [], [], []
    for i in range(seq):
        acc = jnp.zeros((user, hidden), jnp.float32)
        c_acc = jnp.zeros((user, hidden), jnp.float32)
        ty_acc = jnp.zeros((user, hidden), jnp.float32)
        sum_w = jnp.zeros((user, 1), jnp.float32)
        c_sum_w = jnp.zeros((user, 1), jnp.float32)
        type_sum_w = jnp.zeros((user, 1), jnp.float32)
        for j in range(i + 1):
            dist_t = t[i] - t[j]
            dist_s = jnp.linalg.norm(s[i] - s[j], axis=-1)
            a_j = f_t(dist_t)[:, None]
            b_j = f_s(dist_s)[:, None]
            w_j = a_j * b_j + 1e-10
            c_w_j = a_j + 1e-10
            type_w_j = b_j + 1e-10
            sum_w = sum_w + w_j
            c_sum_w = c_sum_w + c_w_j
            type_sum_w = type_sum_w + w_j
            acc = acc + w_j * out_notime[j]
            c_acc = c_acc + c_w_j * c_out_notime[j]
            ty_acc = ty_acc + type_w_j * type_out_notime[j]
        out_w.append(acc / sum_w)
        c_out_w.append(c_acc / c_sum_w)
        type_out_w.append(ty_acc / type_sum_w)
    return jnp.stack(out_w), jnp.stack(c_out_w), jnp.stack(type_out_w)


if __name__ == "__main__":
    key = jax.random.PRNGKey(0)
    k_t, k_s, k_o, k_c, k_ty, k_t2, k_s2 = jax.random.split(key, 7)

    seq_len, user_len, hidden = 8, 16, 32
    lambda_t = jnp.ones((1,), jnp.float32) * 0.5   # temporal decay rate
    lambda_s = jnp.ones((1,), jnp.float32) * 1.0   # spatial decay rate

    # timestamps (seconds, sorted along seq) and 2-D coordinates
    t = jnp.sort(jax.random.uniform(k_t, (seq_len, user_len), jnp.float32,
                                    minval=0.0, maxval=86400.0), axis=0)
    s = jax.random.uniform(k_s, (seq_len, user_len, 2), jnp.float32,
                           minval=0.0, maxval=1.0)

    # stand-ins for decoder(seq_model(embedding)) outputs, [seq, user, hidden]
    out_nt = jax.random.normal(k_o, (seq_len, user_len, hidden), jnp.float32)
    c_out_nt = jax.random.normal(k_c, (seq_len, user_len, hidden), jnp.float32)
    type_out_nt = jax.random.normal(k_ty, (seq_len, user_len, hidden), jnp.float32)

    # 1) fused pairwise weight kernel (distances + tril mask in-kernel)
    got_w = jax.block_until_ready(flashback_weights(t, s, lambda_t, lambda_s))
    ref_w = _reference_weights(t, s, lambda_t, lambda_s)
    for g, r in zip(got_w, ref_w):
        np.testing.assert_allclose(np.asarray(g), np.asarray(r),
                                   rtol=1e-5, atol=1e-5)

    # 2) multi-step 2-D grid with partial i/j blocks and a non-128 user dim
    seq2, user2 = 33, 200
    t2 = jnp.sort(jax.random.uniform(k_t2, (seq2, user2), jnp.float32,
                                     minval=0.0, maxval=86400.0), axis=0)
    s2 = jax.random.uniform(k_s2, (seq2, user2, 2), jnp.float32,
                            minval=0.0, maxval=1.0)
    got2 = jax.block_until_ready(
        flashback_weights(t2, s2, lambda_t, lambda_s, block_i=16, block_j=8))
    ref2 = _reference_weights(t2, s2, lambda_t, lambda_s)
    for g, r in zip(got2, ref2):
        np.testing.assert_allclose(np.asarray(g), np.asarray(r),
                                   rtol=1e-5, atol=1e-5)

    # 3) full weighted-average stage (MXU einsum) vs the literal double loop
    got_agg = jax.block_until_ready(
        flashback_aggregate(out_nt, c_out_nt, type_out_nt, t, s,
                            lambda_t, lambda_s))
    ref_agg = _reference_aggregate(out_nt, c_out_nt, type_out_nt, t, s,
                                   lambda_t, lambda_s)
    for g, r in zip(got_agg, ref_agg):
        np.testing.assert_allclose(np.asarray(g), np.asarray(r),
                                   rtol=1e-4, atol=1e-4)

    print("KERNEL_OK")
</pallas_src>

<mosaic_0001>
module attributes {stable_mosaic.version = 11 : i64} {
  func.func @_pair_weight_kernel(%arg0: i32, %arg1: i32, %arg2: memref<2xf32, #tpu.memory_space<smem>>, %arg3: memref<8x128xf32, #tpu.memory_space<vmem>>, %arg4: memref<8x128xf32, #tpu.memory_space<vmem>>, %arg5: memref<8x128xf32, #tpu.memory_space<vmem>>, %arg6: memref<8x128xf32, #tpu.memory_space<vmem>>, %arg7: memref<8x128xf32, #tpu.memory_space<vmem>>, %arg8: memref<8x128xf32, #tpu.memory_space<vmem>>, %arg9: memref<8x8x128xf32, #tpu.memory_space<vmem>>, %arg10: memref<8x8x128xf32, #tpu.memory_space<vmem>>, %arg11: memref<8x8x128xf32, #tpu.memory_space<vmem>>) attributes {dimension_semantics = [#tpu.dimension_semantics<parallel>, #tpu.dimension_semantics<parallel>], iteration_bounds = array<i64: 1, 1>, scalar_prefetch = 0 : i64, scratch_operands = 0 : i64, tpu.core_type = #tpu.core_type<tc>, window_params = [{transform_indices = @transform_0, window_bounds = array<i64: 2>}, {transform_indices = @transform_1, window_bounds = array<i64: 8, 128>}, {transform_indices = @transform_2, window_bounds = array<i64: 8, 128>}, {transform_indices = @transform_3, window_bounds = array<i64: 8, 128>}, {transform_indices = @transform_4, window_bounds = array<i64: 8, 128>}, {transform_indices = @transform_5, window_bounds = array<i64: 8, 128>}, {transform_indices = @transform_6, window_bounds = array<i64: 8, 128>}, {transform_indices = @transform_7, window_bounds = array<i64: 8, 8, 128>}, {transform_indices = @transform_8, window_bounds = array<i64: 8, 8, 128>}, {transform_indices = @transform_9, window_bounds = array<i64: 8, 8, 128>}]} {
    %c0 = arith.constant 0 : index
    %0 = memref.load %arg2[%c0] : memref<2xf32, #tpu.memory_space<smem>>
    %c1 = arith.constant 1 : index
    %1 = memref.load %arg2[%c1] : memref<2xf32, #tpu.memory_space<smem>>
    %c8_i32 = arith.constant 8 : i32
    %2 = arith.muli %arg0, %c8_i32 : i32
    %c8_i32_0 = arith.constant 8 : i32
    %3 = arith.muli %arg1, %c8_i32_0 : i32
    %c0_1 = arith.constant 0 : index
    %c0_2 = arith.constant 0 : index
    %4 = vector.load %arg4[%c0_1, %c0_2] : memref<8x128xf32, #tpu.memory_space<vmem>>, vector<8x128xf32>
    %c0_3 = arith.constant 0 : index
    %c0_4 = arith.constant 0 : index
    %5 = vector.load %arg6[%c0_3, %c0_4] : memref<8x128xf32, #tpu.memory_space<vmem>>, vector<8x128xf32>
    %c0_5 = arith.constant 0 : index
    %c0_6 = arith.constant 0 : index
    %6 = vector.load %arg8[%c0_5, %c0_6] : memref<8x128xf32, #tpu.memory_space<vmem>>, vector<8x128xf32>
    %7 = tpu.iota {dimensions = array<i32: 0>} : vector<8x128xi32>
    %8 = vector.broadcast %3 : i32 to vector<8x128xi32>
    %9 = arith.addi %7, %8 : vector<8x128xi32>
    %cst = arith.constant 1.000000e-10 : f32
    %cst_7 = arith.constant 0.000000e+00 : f32
    %c0_i32 = arith.constant 0 : i32
    %c8_i32_8 = arith.constant 8 : i32
    %10 = arith.addi %c0_i32, %c8_i32_8 : i32
    %c1_i32 = arith.constant 1 : i32
    scf.for %arg12 = %c0_i32 to %10 step %c1_i32  : i32 {
      %c1_i32_10 = arith.constant 1 : i32
      %11 = arith.muli %arg12, %c1_i32_10 : i32
      %c0_i32_11 = arith.constant 0 : i32
      %12 = arith.addi %c0_i32_11, %11 : i32
      %13 = arith.index_cast %12 : i32 to index
      %c0_12 = arith.constant 0 : index
      %14 = vector.load %arg3[%13, %c0_12] : memref<8x128xf32, #tpu.memory_space<vmem>>, vector<1x128xf32>
      %15 = arith.index_cast %12 : i32 to index
      %c0_13 = arith.constant 0 : index
      %16 = vector.load %arg5[%15, %c0_13] : memref<8x128xf32, #tpu.memory_space<vmem>>, vector<1x128xf32>
      %17 = arith.index_cast %12 : i32 to index
      %c0_14 = arith.constant 0 : index
      %18 = vector.load %arg7[%17, %c0_14] : memref<8x128xf32, #tpu.memory_space<vmem>>, vector<1x128xf32>
      %19 = vector.broadcast %14 : vector<1x128xf32> to vector<8x128xf32>
      %20 = arith.subf %19, %4 : vector<8x128xf32>
      %21 = vector.broadcast %16 : vector<1x128xf32> to vector<8x128xf32>
      %22 = arith.subf %21, %5 : vector<8x128xf32>
      %23 = vector.broadcast %18 : vector<1x128xf32> to vector<8x128xf32>
      %24 = arith.subf %23, %6 : vector<8x128xf32>
      %25 = arith.mulf %22, %22 : vector<8x128xf32>
      %26 = arith.mulf %24, %24 : vector<8x128xf32>
      %27 = arith.addf %25, %26 : vector<8x128xf32>
      %28 = math.sqrt %27 : vector<8x128xf32>
      %cst_15 = arith.constant 7.2722054E-5 : f32
      %29 = vector.broadcast %cst_15 : f32 to vector<8x128xf32>
      %30 = arith.mulf %20, %29 : vector<8x128xf32>
      %31 = math.cos %30 : vector<8x128xf32>
      %cst_16 = arith.constant 1.000000e+00 : f32
      %32 = vector.broadcast %cst_16 : f32 to vector<8x128xf32>
      %33 = arith.addf %31, %32 : vector<8x128xf32>
      %cst_17 = arith.constant 5.000000e-01 : f32
      %34 = vector.broadcast %cst_17 : f32 to vector<8x128xf32>
      %35 = arith.mulf %33, %34 : vector<8x128xf32>
      %36 = vector.broadcast %0 : f32 to vector<8x128xf32>
      %37 = arith.mulf %20, %36 : vector<8x128xf32>
      %38 = math.exp %37 : vector<8x128xf32>
      %39 = arith.mulf %35, %38 : vector<8x128xf32>
      %40 = vector.broadcast %1 : f32 to vector<8x128xf32>
      %41 = arith.mulf %28, %40 : vector<8x128xf32>
      %42 = math.exp %41 : vector<8x128xf32>
      %43 = arith.addi %2, %12 : i32
      %44 = vector.broadcast %43 : i32 to vector<8x128xi32>
      %45 = arith.cmpi sle, %9, %44 : vector<8x128xi32>
      %46 = arith.mulf %39, %42 : vector<8x128xf32>
      %47 = vector.broadcast %cst : f32 to vector<8x128xf32>
      %48 = arith.addf %46, %47 : vector<8x128xf32>
      %49 = vector.broadcast %cst_7 : f32 to vector<8x128xf32>
      %50 = arith.select %45, %48, %49 : vector<8x128xi1>, vector<8x128xf32>
      %51 = arith.index_cast %12 : i32 to index
      %c0_18 = arith.constant 0 : index
      %c0_19 = arith.constant 0 : index
      %52 = vector.load %arg9[%51, %c0_18, %c0_19] : memref<8x8x128xf32, #tpu.memory_space<vmem>>, vector<1x8x128xf32>
      %53 = vector.shape_cast %52 : vector<1x8x128xf32> to vector<8x128xf32>
      %54 = vector.shape_cast %50 : vector<8x128xf32> to vector<1x8x128xf32>
      tpu.vector_store %arg9[%51, %c0_18, %c0_19], %54 {strides = array<i32>} : memref<8x8x128xf32, #tpu.memory_space<vmem>>, vector<1x8x128xf32>,
      %55 = vector.broadcast %cst : f32 to vector<8x128xf32>
      %56 = arith.addf %39, %55 : vector<8x128xf32>
      %57 = vector.broadcast %cst_7 : f32 to vector<8x128xf32>
      %58 = arith.select %45, %56, %57 : vector<8x128xi1>, vector<8x128xf32>
      %59 = arith.index_cast %12 : i32 to index
      %c0_20 = arith.constant 0 : index
      %c0_21 = arith.constant 0 : index
      %60 = vector.load %arg10[%59, %c0_20, %c0_21] : memref<8x8x128xf32, #tpu.memory_space<vmem>>, vector<1x8x128xf32>
      %61 = vector.shape_cast %60 : vector<1x8x128xf32> to vector<8x128xf32>
      %62 = vector.shape_cast %58 : vector<8x128xf32> to vector<1x8x128xf32>
      tpu.vector_store %arg10[%59, %c0_20, %c0_21], %62 {strides = array<i32>} : memref<8x8x128xf32, #tpu.memory_space<vmem>>, vector<1x8x128xf32>,
      %63 = vector.broadcast %cst : f32 to vector<8x128xf32>
      %64 = arith.addf %42, %63 : vector<8x128xf32>
      %65 = vector.broadcast %cst_7 : f32 to vector<8x128xf32>
      %66 = arith.select %45, %64, %65 : vector<8x128xi1>, vector<8x128xf32>
      %67 = arith.index_cast %12 : i32 to index
      %c0_22 = arith.constant 0 : index
      %c0_23 = arith.constant 0 : index
      %68 = vector.load %arg11[%67, %c0_22, %c0_23] : memref<8x8x128xf32, #tpu.memory_space<vmem>>, vector<1x8x128xf32>
      %69 = vector.shape_cast %68 : vector<1x8x128xf32> to vector<8x128xf32>
      %70 = vector.shape_cast %66 : vector<8x128xf32> to vector<1x8x128xf32>
      tpu.vector_store %arg11[%67, %c0_22, %c0_23], %70 {strides = array<i32>} : memref<8x8x128xf32, #tpu.memory_space<vmem>>, vector<1x8x128xf32>,
    }
    %c8_i32_9 = arith.constant 8 : i32
    return
  }
  func.func @transform_0(%arg0: i32, %arg1: i32) -> i32 {
    %c0_i32 = arith.constant 0 : i32
    %c0_i32_0 = arith.constant 0 : i32
    return %c0_i32 : i32
  }
  func.func @transform_1(%arg0: i32, %arg1: i32) -> (i32, i32) {
    %c0_i32 = arith.constant 0 : i32
    %c0_i32_0 = arith.constant 0 : i32
    return %arg0, %c0_i32 : i32, i32
  }
  func.func @transform_2(%arg0: i32, %arg1: i32) -> (i32, i32) {
    %c0_i32 = arith.constant 0 : i32
    %c0_i32_0 = arith.constant 0 : i32
    return %arg1, %c0_i32 : i32, i32
  }
  func.func @transform_3(%arg0: i32, %arg1: i32) -> (i32, i32) {
    %c0_i32 = arith.constant 0 : i32
    %c0_i32_0 = arith.constant 0 : i32
    return %arg0, %c0_i32 : i32, i32
  }
  func.func @transform_4(%arg0: i32, %arg1: i32) -> (i32, i32) {
    %c0_i32 = arith.constant 0 : i32
    %c0_i32_0 = arith.constant 0 : i32
    return %arg1, %c0_i32 : i32, i32
  }
  func.func @transform_5(%arg0: i32, %arg1: i32) -> (i32, i32) {
    %c0_i32 = arith.constant 0 : i32
    %c0_i32_0 = arith.constant 0 : i32
    return %arg0, %c0_i32 : i32, i32
  }
  func.func @transform_6(%arg0: i32, %arg1: i32) -> (i32, i32) {
    %c0_i32 = arith.constant 0 : i32
    %c0_i32_0 = arith.constant 0 : i32
    return %arg1, %c0_i32 : i32, i32
  }
  func.func @transform_7(%arg0: i32, %arg1: i32) -> (i32, i32, i32) {
    %c0_i32 = arith.constant 0 : i32
    %c0_i32_0 = arith.constant 0 : i32
    return %arg0, %arg1, %c0_i32 : i32, i32, i32
  }
  func.func @transform_8(%arg0: i32, %arg1: i32) -> (i32, i32, i32) {
    %c0_i32 = arith.constant 0 : i32
    %c0_i32_0 = arith.constant 0 : i32
    return %arg0, %arg1, %c0_i32 : i32, i32, i32
  }
  func.func @transform_9(%arg0: i32, %arg1: i32) -> (i32, i32, i32) {
    %c0_i32 = arith.constant 0 : i32
    %c0_i32_0 = arith.constant 0 : i32
    return %arg0, %arg1, %c0_i32 : i32, i32, i32
  }
}

</mosaic_0001>

<llo_original>
// kernel: flashback_weights.1
$region0: #{flashback_weights.1}
  #allocation0 [shape = 'u32[]', space=smem, size = 0x4, offset = 0x4, fixed_abs, tag = 'smem constant byte address 0x4 - core index']
  #allocation1 [shape = 'u32[144,128]{1,0:T(1,128)}', space=vmem, size = 0x12000, scoped, tag = 'internal scratch']
  %s0 = inlined_call_operand.vmem [shape: f32[2], index: 0, kind: input, shape index: {}]
  %s1 = inlined_call_operand.vmem [shape: f32[8,128], index: 1, kind: input, shape index: {}, may-alias: {1,2}]
  %s2 = inlined_call_operand.vmem [shape: f32[8,128], index: 2, kind: input, shape index: {}, may-alias: {1,2}]
  %s3 = inlined_call_operand.vmem [shape: f32[8,128], index: 3, kind: input, shape index: {}, may-alias: {3,4}]
  %s4 = inlined_call_operand.vmem [shape: f32[8,128], index: 4, kind: input, shape index: {}, may-alias: {3,4}]
  %s5 = inlined_call_operand.vmem [shape: f32[8,128], index: 5, kind: input, shape index: {}, may-alias: {5,6}]
  %s6 = inlined_call_operand.vmem [shape: f32[8,128], index: 6, kind: input, shape index: {}, may-alias: {5,6}]
  %s7 = inlined_call_operand.hbm [shape: f32[8,8,128], index: 7, kind: output, shape index: {0}]
  %s8 = inlined_call_operand.hbm [shape: f32[8,8,128], index: 8, kind: output, shape index: {1}]
  %s9 = inlined_call_operand.hbm [shape: f32[8,8,128], index: 9, kind: output, shape index: {2}]
  %10 = xla_tuple %s7, %s8, %s9
  %s11 = sld [smem:[#allocation0]]
  $region65: #{flashback_weights.1} parent=0
    _
  %s13 = ssub.s32 1, %s11
  %s14 = scalar_select 0, %s13, %s11
  $region1: #{flashback_weights.1} parent=0
    #allocation2 [shape = 'u8[512]{0}', space=smem, size = 0x200, scoped, tag = 'input window, operand 0, single buffered']
    #allocation3 [shape = 's32[1]{0}', space=sflag, size = 0x4, scoped, tag = 'scoped memory for flashback_weights.1']
    #allocation4 [shape = 's32[1]{0}', space=sflag, size = 0x4, scoped, tag = 'scoped memory for flashback_weights.1']
    #allocation5 [shape = 'u8[32768]{0}', space=vmem, size = 0x8000, scoped, tag = 'output window, operand 0, single buffered']
    #allocation6 [shape = 'u8[32768]{0}', space=vmem, size = 0x8000, scoped, tag = 'output window, operand 1, single buffered']
    #allocation7 [shape = 's32[1]{0}', space=sflag, size = 0x4, scoped, tag = 'scoped memory for flashback_weights.1']
    #allocation8 [shape = 'u8[32768]{0}', space=vmem, size = 0x8000, scoped, tag = 'output window, operand 2, single buffered']
    %15 = vsyncpa [#allocation4], 0
    %16 = vsyncpa [#allocation3], 0
    %17 = vsyncpa [#allocation7], 0
    // Predicated region
    $region2: #{flashback_weights.1} parent=1 // pred_check
      _
    $region3: #{flashback_weights.1} parent=1 // pred_check_branch
      %19 = sbr.rel (0) target = $region5
    $region4: #{flashback_weights.1} parent=1 // pred_region
      %s21 = ssub.s32 16, 16
      %22 = vsyncadd [#allocation4], %s21
      %s24 = sshll.u32 %s0, 4
      %s25 = int_to_ptr.vmem [resolvable:$true] %s24
      %27 = dma.vmem_to_smem %s25, 16, [#allocation2], [#allocation4]
    $region5: #{flashback_weights.1} parent=1 // pred_fallthru
      _
    // Predicated region
    $region6: #{flashback_weights.1} parent=1 // pred_check
      _
    $region7: #{flashback_weights.1} parent=1 // pred_check_branch
      %29 = sbr.rel (0) target = $region9
    $region8: #{flashback_weights.1} parent=1 // pred_region
      _
    $region9: #{flashback_weights.1} parent=1 // pred_fallthru
      _
    // Predicated region
    $region10: #{flashback_weights.1} parent=1 // pred_check
      _
    $region11: #{flashback_weights.1} parent=1 // pred_check_branch
      %31 = sbr.rel (0) target = $region13
    $region12: #{flashback_weights.1} parent=1 // pred_region
      _
    $region13: #{flashback_weights.1} parent=1 // pred_fallthru
      _
    // Predicated region
    $region14: #{flashback_weights.1} parent=1 // pred_check
      _
    $region15: #{flashback_weights.1} parent=1 // pred_check_branch
      %33 = sbr.rel (0) target = $region17
    $region16: #{flashback_weights.1} parent=1 // pred_region
      _
    $region17: #{flashback_weights.1} parent=1 // pred_fallthru
      _
    // Predicated region
    $region18: #{flashback_weights.1} parent=1 // pred_check
      _
    $region19: #{flashback_weights.1} parent=1 // pred_check_branch
      %35 = sbr.rel (0) target = $region21
    $region20: #{flashback_weights.1} parent=1 // pred_region
      _
    $region21: #{flashback_weights.1} parent=1 // pred_fallthru
      _
    // Predicated region
    $region22: #{flashback_weights.1} parent=1 // pred_check
      _
    $region23: #{flashback_weights.1} parent=1 // pred_check_branch
      %37 = sbr.rel (0) target = $region25
    $region24: #{flashback_weights.1} parent=1 // pred_region
      _
    $region25: #{flashback_weights.1} parent=1 // pred_fallthru
      _
    // Predicated region
    $region26: #{flashback_weights.1} parent=1 // pred_check
      _
    $region27: #{flashback_weights.1} parent=1 // pred_check_branch
      %39 = sbr.rel (0) target = $region29
    $region28: #{flashback_weights.1} parent=1 // pred_region
      _
    $region29: #{flashback_weights.1} parent=1 // pred_fallthru
      _
    // Predicated region
    $region30: #{flashback_weights.1} parent=1 // pred_check
      _
    $region31: #{flashback_weights.1} parent=1 // pred_check_branch
      %41 = sbr.rel (0) target = $region33
    $region32: #{flashback_weights.1} parent=1 // pred_region
      %42 = dma.done [#allocation4], 16
    $region33: #{flashback_weights.1} parent=1 // pred_fallthru
      _
    %43 = sfence
    %s44 = sld [smem:[#allocation2]]
    %s45 = sld [smem:[#allocation2 + $0x1]]
    %s46 = smul.u32 0, 8
    %s47 = smul.u32 0, 8
    %v48 = vld [vmem:[%s2] sm:$0xff]
    %v49 = vld [vmem:[%s4] sm:$0xff]
    %v50 = vld [vmem:[%s6] sm:$0xff]
    %v51 = vlaneseq
    %v52 = vshrl.u32 %v51, 7
    %v53 = vstv %s47
    %v54 = vadd.s32 %v52, %v53
    loop: start=0, step=1, limit=8
    $region34: #{flashback_weights.1} parent=1 // loop_pre_header
      _
    $region35: #{flashback_weights.1} parent=1 // loop_header
      %s56 = sphi 0, %s60
      %p57 = scmp.ge.s32.totalorder %s56, 8
    $region36: #{flashback_weights.1} parent=1 // loop_header_branch
      %59 = sbr.rel (%p57) target = $region40
    $region37: #{flashback_weights.1} parent=1 // loop_body
      %s61 = scalar_lea.vmem %s1, %s56
      %v62 = vld [vmem:[%s61] sm:$0x1]
      %s63 = scalar_lea.vmem %s3, %s56
      %v64 = vld [vmem:[%s63] sm:$0x1]
      %s65 = scalar_lea.vmem %s5, %s56
      %v66 = vld [vmem:[%s65] sm:$0x1]
      %v67 = vlaneseq
      %v68 = vshrl.u32 %v67, 7
      %v69 = vsub.s32 0, %v68
      %v70 = vrot.slane %v62, %v69
      %v71 = vsub.f32 %v70, %v48
      %v72 = vlaneseq
      %v73 = vshrl.u32 %v72, 7
      %v74 = vsub.s32 0, %v73
      %v75 = vrot.slane %v64, %v74
      %v76 = vsub.f32 %v75, %v49
      %v77 = vlaneseq
      %v78 = vshrl.u32 %v77, 7
      %v79 = vsub.s32 0, %v78
      %v80 = vrot.slane %v66, %v79
      %v81 = vsub.f32 %v80, %v50
      %v82 = vmul.f32 %v76, %v76
      %v83 = vmul.f32 %v81, %v81
      %v84 = vadd.f32 %v82, %v83
      %v85 = vrsqrt.pop %v84
      %v86 = vmul.f32 %v84, %v85
      %vm87 = vcmp.eq.f32.partialorder %v84, inf
      %v88 = vsel %vm87, %v84, %v86
      %vm89 = vcmp.eq.f32.partialorder %v84, 0.0
      %v90 = vand.u32 %v84, 2147483648
      %v91 = vsel %vm89, %v90, %v88
      %v92 = vmul.f32 %v71, 7.2722054e-05
      %v93 = vand.u32 2147483647, %v92
      %vm94 = vcmp.le.f32.partialorder %v93, 0.7853982
      %vm95 = vcmp.lt.s32.totalorder %v92, 0
      %v96 = vand.u32 %v92, 2139095040
      %v97 = vshrl.u32 %v96, 23
      %v98 = vsub.s32 %v97, 127
      %v99 = vand.u32 2147483647, %v92
      %v100 = vand.u32 %v99, 8388607
      %v101 = vor.u32 %v100, 8388608
      %v102 = vsub.s32 0, %v101
      %v103 = vadd.s32 %v98, 1
      %vm104 = vcmp.gt.s32.totalorder %v103, 0
      %v105 = vsel %vm104, %v103, 0
      %v106 = vshrl.u32 %v105, 5
      %v107 = vand.u32 %v105, 31
      %v108 = vsub.s32 32, %v107
      %v109 = vshrl.u32 683565275, %v108
      %v110 = vshll.u32 683565275, %v107
      %v111 = vshrl.u32 2475754826, %v108
      %v112 = vor.u32 %v110, %v111
      %v113 = vshll.u32 2475754826, %v107
      %v114 = vshrl.u32 2131351028, %v108
      %v115 = vor.u32 %v113, %v114
      %v116 = vshll.u32 2131351028, %v107
      %v117 = vshrl.u32 2102212464, %v108
      %v118 = vor.u32 %v116, %v117
      %v119 = vshll.u32 2102212464, %v107
      %v120 = vshrl.u32 920167782, %v108
      %v121 = vor.u32 %v119, %v120
      %v122 = vshll.u32 920167782, %v107
      %v123 = vshrl.u32 1326507024, %v108
      %v124 = vor.u32 %v122, %v123
      %vm125 = vcmp.lt.s32.totalorder %v106, 1
      %vm126 = vcmp.lt.s32.totalorder %v106, 2
      %vm127 = vcmp.lt.s32.totalorder %v106, 3
      %vm128 = vcmp.lt.s32.totalorder %v106, 4
      %v129 = vsel %vm125, %v109, %v112
      %v130 = vsel %vm128, %v118, 2102212464
      %v131 = vsel %vm127, %v115, %v130
      %v132 = vsel %vm126, %v129, %v131
      %v133 = vsel %vm125, %v112, %v115
      %v134 = vsel %vm128, %v121, 920167782
      %v135 = vsel %vm127, %v118, %v134
      %v136 = vsel %vm126, %v133, %v135
      %v137 = vsel %vm125, %v115, %v118
      %v138 = vsel %vm128, %v124, 1326507024
      %v139 = vsel %vm127, %v121, %v138
      %v140 = vsel %vm126, %v137, %v139
      %v141 = vshll.u32 %v101, 8
      %v142 = vmul.u32.u64.compose %v141, %v140
      %v143 = vextract.low.u32 %v142
      %v144 = vextract.high.u32 %v142
      %v145 = vmul.u32.u64.compose %v141, %v136
      %v146 = vextract.low.u32 %v145
      %v147 = vextract.high.u32 %v145
      %v148 = vmul.u32 %v141, %v132
      %v149 = vadd.s32 %v144, %v146
      %vm150 = vc.u32 %v144, %v146
      %v151 = vadd.s32 %v147, 1
      %v152 = vsel %vm150, %v151, %v147
      %v153 = vadd.s32 %v148, %v152
      %v154 = vadd.s32 %v153, 536870912
      %v155 = vshrl.u32 %v154, 30
      %v156 = vshll.u32 %v155, 30
      %v157 = vsub.s32 %v153, %v156
      %vm158 = vcmp.lt.s32.totalorder %v157, 0
      %v159 = vsub.s32 0, %v157
      %v160 = vsel %vm158, %v159, %v157
      %v161 = vclz %v160
      %v162 = vsub.s32 %v161, 2
      %vm163 = vcmp.gt.s32.totalorder 0, %v162
      %v164 = vsel %vm163, 0, %v162
      %v165 = vsub.s32 32, %v164
      %v166 = vshll.u32 %v157, %v164
      %v167 = vshrl.u32 %v149, %v165
      %v168 = vor.u32 %v166, %v167
      %v169 = vsub.s32 4294967266, %v164
      %v170 = vadd.s32 %v169, 127
      %v171 = vshll.u32 %v170, 23
      %v172 = vor.u32 4788187, %v171
      %v173 = vand.u32 2147483647, %v172
      %v175 = vcvt.s32.f32 %v168
      %v176 = vmul.f32 %v175, %v173
      %v177 = vxor.u32 %v176, 2147483648
      %v178 = vsel %vm95, %v177, %v176
      %v179 = vsub.s32 4, %v155
      %v180 = vsel %vm95, %v179, %v155
      %v181 = vsel %vm94, %v92, %v178
      %v182 = vsel %vm94, 0, %v180
      %v183 = vcosq.f32.pop %v181
      %v184 = vsinq.f32.pop %v181
      %vm185 = vweird.f32 %v92
      %v186 = vand.u32 %v182, 3
      %vm187 = vcmp.lt.s32.totalorder %v186, 2
      %vm188 = vcmp.eq.s32.totalorder %v186, 0
      %v189 = vxor.u32 %v184, 2147483648
      %v190 = vsel %vm188, %v183, %v189
      %vm191 = vcmp.eq.s32.totalorder %v186, 2
      %v192 = vxor.u32 %v183, 2147483648
      %v193 = vsel %vm191, %v192, %v184
      %v194 = vsel %vm187, %v190, %v193
      %v195 = vsel %vm185, nan, %v194
      %v196 = vadd.f32 %v195, 1.0
      %v197 = vmul.f32 %v196, 0.5
      %v198 = vstv %s44
      %v199 = vmul.f32 %v71, %v198
      %v200 = vmul.f32 %v199, 1.442695
      %v201 = vpow.pop %v200
      %v202 = vmul.f32 %v197, %v201
      %v203 = vstv %s45
      %v204 = vmul.f32 %v91, %v203
      %v205 = vmul.f32 %v204, 1.442695
      %v206 = vpow.pop %v205
      %s207 = sadd.s32 %s46, %s56
      %v208 = vstv %s207
      %vm209 = vcmp.le.s32.totalorder %v54, %v208
      %v210 = vmul.f32 %v202, %v206
      %v211 = vadd.f32 %v210, 1e-10
      %v212 = vsel %vm209, %v211, 0.0
      %s213 = smul.u32 %s56, 8
      %s214 = scalar_lea.vmem [#allocation5], %s213
      %215 = vst [vmem:[%s214] sm:$0xff] %v212
      %v216 = vadd.f32 %v202, 1e-10
      %v217 = vsel %vm209, %v216, 0.0
      %s218 = scalar_lea.vmem [#allocation6], %s213
      %219 = vst [vmem:[%s218] sm:$0xff] %v217
      %v220 = vadd.f32 %v206, 1e-10
      %v221 = vsel %vm209, %v220, 0.0
      %s222 = scalar_lea.vmem [#allocation8], %s213
      %223 = vst [vmem:[%s222] sm:$0xff] %v221
    $region38: #{flashback_weights.1} parent=1 // loop_footer
      %s60 = sadd.s32 1, %s56
    $region39: #{flashback_weights.1} parent=1 // loop_footer_branch
      %55 = sbr.rel target = $region35
    $region40: #{flashback_weights.1} parent=1 // loop_exit
      _
    // Predicated region
    $region41: #{flashback_weights.1} parent=1 // pred_check
      _
    $region42: #{flashback_weights.1} parent=1 // pred_check_branch
      %225 = sbr.rel (0) target = $region44
    $region43: #{flashback_weights.1} parent=1 // pred_region
      %s227 = ssub.s32 1024, 1024
      %228 = vsyncadd [#allocation3], %s227
      %s229 = sshll.u32 [#allocation5], 4
      %s230 = int_to_ptr.vmem [resolvable:$true] %s229
      %235 = dma.vmem_to_hbm [thread:$0]  %s230, 1024, %s7, [#allocation3], 128, 128, 8
    $region44: #{flashback_weights.1} parent=1 // pred_fallthru
      _
    // Predicated region
    $region45: #{flashback_weights.1} parent=1 // pred_check
      _
    $region46: #{flashback_weights.1} parent=1 // pred_check_branch
      %237 = sbr.rel (0) target = $region48
    $region47: #{flashback_weights.1} parent=1 // pred_region
      %s239 = ssub.s32 1024, 1024
      %240 = vsyncadd [#allocation7], %s239
      %s241 = sshll.u32 [#allocation6], 4
      %s242 = int_to_ptr.vmem [resolvable:$true] %s241
      %247 = dma.vmem_to_hbm [thread:$0]  %s242, 1024, %s8, [#allocation7], 128, 128, 8
    $region48: #{flashback_weights.1} parent=1 // pred_fallthru
      _
    // Predicated region
    $region49: #{flashback_weights.1} parent=1 // pred_check
      _
    $region50: #{flashback_weights.1} parent=1 // pred_check_branch
      %249 = sbr.rel (0) target = $region52
    $region51: #{flashback_weights.1} parent=1 // pred_region
      %s251 = ssub.s32 1024, 1024
      %252 = vsyncadd [#allocation7], %s251
      %s253 = sshll.u32 [#allocation8], 4
      %s254 = int_to_ptr.vmem [resolvable:$true] %s253
      %259 = dma.vmem_to_hbm [thread:$0]  %s254, 1024, %s9, [#allocation7], 128, 128, 8
    $region52: #{flashback_weights.1} parent=1 // pred_fallthru
      _
    // Predicated region
    $region53: #{flashback_weights.1} parent=1 // pred_check
      _
    $region54: #{flashback_weights.1} parent=1 // pred_check_branch
      %261 = sbr.rel (0) target = $region56
    $region55: #{flashback_weights.1} parent=1 // pred_region
      %262 = dma.done [#allocation3], 1024
    $region56: #{flashback_weights.1} parent=1 // pred_fallthru
      _
    // Predicated region
    $region57: #{flashback_weights.1} parent=1 // pred_check
      _
    $region58: #{flashback_weights.1} parent=1 // pred_check_branch
      %264 = sbr.rel (0) target = $region60
    $region59: #{flashback_weights.1} parent=1 // pred_region
      %265 = dma.done [#allocation7], 1024
    $region60: #{flashback_weights.1} parent=1 // pred_fallthru
      _
    // Predicated region
    $region61: #{flashback_weights.1} parent=1 // pred_check
      _
    $region62: #{flashback_weights.1} parent=1 // pred_check_branch
      %267 = sbr.rel (0) target = $region64
    $region63: #{flashback_weights.1} parent=1 // pred_region
      %268 = dma.done [#allocation7], 1024
    $region64: #{flashback_weights.1} parent=1 // pred_fallthru
      _
    %269 = vsyncpa [#allocation3], 1
    %270 = vsyncpa [#allocation7], 1
    %271 = vsyncpa [#allocation4], 1

</llo_original>
